<compile_context>
chip_gen: v7x
topology: tpu7x:2x2x1
jax: 0.10.0
libtpu: 0.0.40
codegen_flags: <defaults>
</compile_context>

<pallas_src>
import functools

import jax
import jax.numpy as jnp
from jax import lax
from jax.experimental import pallas as pl
from jax.experimental.pallas import tpu as pltpu


def hidden_layer_kernel(seed_ref, x_ref, w_ref, b_ref, g_ref, beta_ref, o_ref,
                        *, p, training, include_layer_norm, eps):
    # Linear: y = x @ W^T + b.  W stays (OUT, IN); contract shared IN axis
    # directly on the MXU (no wrapper transpose, no operand upcast).
    y = lax.dot_general(
        x_ref[...], w_ref[...],
        dimension_numbers=(((1,), (1,)), ((), ())),
        preferred_element_type=jnp.float32,
    )
    y = y + b_ref[...].astype(jnp.float32)

    # ReLU
    y = jnp.maximum(y, 0.0)

    # Dropout (train mode only; eval mode is identity, matching nn.Dropout).
    # TODO(synk): mask is an in-kernel stateless hash PRNG (lowbias32), not
    # torch's RNG stream; same Bernoulli(keep=1-p) + 1/(1-p) scaling law.
    if training and p > 0.0:
        tb, n_out = y.shape
        row_ids = (pl.program_id(0) * tb
                   + lax.broadcasted_iota(jnp.int32, y.shape, 0)).astype(jnp.uint32)
        col_ids = lax.broadcasted_iota(jnp.int32, y.shape, 1).astype(jnp.uint32)
        seed_u32 = seed_ref[0].astype(jnp.uint32)
        v = row_ids * jnp.uint32(n_out) + col_ids + seed_u32 * jnp.uint32(0x9E3779B9)
        v = (v ^ (v >> jnp.uint32(16))) * jnp.uint32(0x7FEB352D)
        v = (v ^ (v >> jnp.uint32(15))) * jnp.uint32(0x846CA68B)
        v = v ^ (v >> jnp.uint32(16))
        # Signed-safe threshold compare on the top 31 bits: P(drop) = p.
        bits31 = (v >> jnp.uint32(1)).astype(jnp.int32)
        thr31 = jnp.int32(min(int(p * (1 << 31)), (1 << 31) - 1))
        keep = bits31 >= thr31
        y = jnp.where(keep, y * jnp.float32(1.0 / (1.0 - p)), jnp.float32(0.0))

    # LayerNorm over the feature (last) axis, matching nn.LayerNorm(output_size).
    if include_layer_norm:
        mean = jnp.mean(y, axis=-1, keepdims=True)
        cent = y - mean
        var = jnp.mean(cent * cent, axis=-1, keepdims=True)
        y = cent * lax.rsqrt(var + eps)
        y = y * g_ref[...].astype(jnp.float32) + beta_ref[...].astype(jnp.float32)

    o_ref[...] = y.astype(o_ref.dtype)


def hidden_layer(x, w, b, gamma, beta, *, dropout_p, training,
                 include_layer_norm, seed=0, eps=1e-5, batch_tile=512):
    B, IN = x.shape
    OUT, IN_w = w.shape
    assert IN_w == IN, "weight must be (OUT, IN) like nn.Linear"

    b2 = b.reshape(1, OUT)
    g2 = gamma.reshape(1, OUT)
    be2 = beta.reshape(1, OUT)
    seed_arr = jnp.asarray([seed], dtype=jnp.int32)

    # Batch tile: whole batch if small (block == full dim is always legal),
    # else 512-row tiles (multiple of 8 sublanes); last partial tile is masked.
    TB = B if B <= batch_tile else batch_tile
    grid = (pl.cdiv(B, TB),)

    kernel = functools.partial(
        hidden_layer_kernel,
        p=float(dropout_p),
        training=bool(training),
        include_layer_norm=bool(include_layer_norm),
        eps=float(eps),
    )

    # VMEM budget: resident W + small vectors + double-buffered x / out tiles.
    isz = jnp.dtype(x.dtype).itemsize
    wsz = jnp.dtype(w.dtype).itemsize
    need = (OUT * IN * wsz + 3 * OUT * 4
            + 2 * TB * IN * isz + 2 * TB * OUT * isz)
    vmem_limit = min(max(int(need * 1.5) + (8 << 20), 32 << 20), 64 << 20)
    # TODO(synk): if the resident weight alone approaches v7x's 64 MiB VMEM,
    # add a K (IN) grid axis ('arbitrary') with an f32 accumulator scratch.

    return pl.pallas_call(
        kernel,
        out_shape=jax.ShapeDtypeStruct((B, OUT), x.dtype),
        grid=grid,
        in_specs=[
            pl.BlockSpec(memory_space=pltpu.MemorySpace.SMEM),      # seed scalar
            pl.BlockSpec((TB, IN), lambda i: (i, 0)),               # x batch tile
            pl.BlockSpec((OUT, IN), lambda i: (0, 0)),              # W resident
            pl.BlockSpec((1, OUT), lambda i: (0, 0)),               # bias
            pl.BlockSpec((1, OUT), lambda i: (0, 0)),               # gamma
            pl.BlockSpec((1, OUT), lambda i: (0, 0)),               # beta
        ],
        out_specs=pl.BlockSpec((TB, OUT), lambda i: (i, 0)),
        compiler_params=pltpu.CompilerParams(
            dimension_semantics=("parallel",),
            vmem_limit_bytes=vmem_limit,
        ),
    )(seed_arr, x, w, b2, g2, be2)


def reference_eval(x, w, b, gamma, beta, include_layer_norm, eps=1e-5):
    """Pure-JAX reference of the eval-mode forward (dropout == identity)."""
    y = x @ w.T + b
    y = jnp.maximum(y, 0.0)
    if include_layer_norm:
        mean = jnp.mean(y, axis=-1, keepdims=True)
        var = jnp.mean((y - mean) ** 2, axis=-1, keepdims=True)
        y = (y - mean) / jnp.sqrt(var + eps)
        y = y * gamma + beta
    return y


if __name__ == "__main__":
    batch, input_size, output_size = 8, 32, 128
    dropout_p = 0.5

    key = jax.random.PRNGKey(0)
    kx, kw, kb = jax.random.split(key, 3)

    x = jax.random.normal(kx, (batch, input_size), dtype=jnp.float32)
    bound = 1.0 / (input_size ** 0.5)
    w = jax.random.uniform(kw, (output_size, input_size), jnp.float32, -bound, bound)
    b = jax.random.uniform(kb, (output_size,), jnp.float32, -bound, bound)
    gamma = jnp.ones((output_size,), jnp.float32)   # nn.LayerNorm default weight
    beta = jnp.zeros((output_size,), jnp.float32)   # nn.LayerNorm default bias

    # Eval mode + LayerNorm: must match the pure-JAX reference.
    out_eval = hidden_layer(x, w, b, gamma, beta, dropout_p=dropout_p,
                            training=False, include_layer_norm=True)
    out_eval = jax.block_until_ready(out_eval)
    ref_ln = reference_eval(x, w, b, gamma, beta, True)
    assert out_eval.shape == (batch, output_size)
    assert jnp.allclose(out_eval, ref_ln, atol=1e-4, rtol=1e-4), "LN eval mismatch"

    # Eval mode, Identity instead of LayerNorm.
    out_eval_nolm = hidden_layer(x, w, b, gamma, beta, dropout_p=dropout_p,
                                 training=False, include_layer_norm=False)
    out_eval_nolm = jax.block_until_ready(out_eval_nolm)
    ref_nolm = reference_eval(x, w, b, gamma, beta, False)
    assert jnp.allclose(out_eval_nolm, ref_nolm, atol=1e-4, rtol=1e-4), "eval mismatch"

    # Training mode (dropout active): every element is either 0 or ref/(1-p).
    out_train = hidden_layer(x, w, b, gamma, beta, dropout_p=dropout_p,
                             training=True, include_layer_norm=False, seed=1234)
    out_train = jax.block_until_ready(out_train)
    scale = 1.0 / (1.0 - dropout_p)
    ok = jnp.isclose(out_train, 0.0, atol=1e-6) | jnp.isclose(
        out_train, ref_nolm * scale, atol=1e-4, rtol=1e-4)
    assert bool(jnp.all(ok)), "dropout output is not {0, scaled-ref}"
    nz = ref_nolm > 1e-6
    kept = jnp.sum((out_train != 0.0) & nz) / jnp.maximum(jnp.sum(nz), 1)
    assert 0.2 < float(kept) < 0.8, "dropout keep fraction far from 1-p"

    # Training mode + LayerNorm: exercises the full fused epilogue.
    out_train_ln = hidden_layer(x, w, b, gamma, beta, dropout_p=dropout_p,
                                training=True, include_layer_norm=True, seed=7)
    out_train_ln = jax.block_until_ready(out_train_ln)
    assert out_train_ln.shape == (batch, output_size)
    assert bool(jnp.all(jnp.isfinite(out_train_ln)))

    print("KERNEL_OK")
</pallas_src>

<mosaic_0001>
module attributes {stable_mosaic.version = 11 : i64} {
  func.func @hidden_layer_kernel(%arg0: i32, %arg1: memref<1xi32, #tpu.memory_space<smem>>, %arg2: memref<8x32xf32, #tpu.memory_space<vmem>>, %arg3: memref<128x32xf32, #tpu.memory_space<vmem>>, %arg4: memref<1x128xf32, #tpu.memory_space<vmem>>, %arg5: memref<1x128xf32, #tpu.memory_space<vmem>>, %arg6: memref<1x128xf32, #tpu.memory_space<vmem>>, %arg7: memref<8x128xf32, #tpu.memory_space<vmem>>) attributes {dimension_semantics = [#tpu.dimension_semantics<parallel>], iteration_bounds = array<i64: 1>, scalar_prefetch = 0 : i64, scratch_operands = 0 : i64, tpu.core_type = #tpu.core_type<tc>, window_params = [{transform_indices = @transform_0, window_bounds = array<i64: 1>}, {transform_indices = @transform_1, window_bounds = array<i64: 8, 32>}, {pipeline_mode = #tpu.pipeline_mode<synchronous>, transform_indices = @transform_2, window_bounds = array<i64: 128, 32>}, {pipeline_mode = #tpu.pipeline_mode<synchronous>, transform_indices = @transform_3, window_bounds = array<i64: 1, 128>}, {pipeline_mode = #tpu.pipeline_mode<synchronous>, transform_indices = @transform_4, window_bounds = array<i64: 1, 128>}, {pipeline_mode = #tpu.pipeline_mode<synchronous>, transform_indices = @transform_5, window_bounds = array<i64: 1, 128>}, {transform_indices = @transform_6, window_bounds = array<i64: 8, 128>}]} {
    %c0 = arith.constant 0 : index
    %c0_0 = arith.constant 0 : index
    %0 = vector.load %arg2[%c0, %c0_0] : memref<8x32xf32, #tpu.memory_space<vmem>>, vector<8x32xf32>
    %c0_1 = arith.constant 0 : index
    %c0_2 = arith.constant 0 : index
    %1 = vector.load %arg3[%c0_1, %c0_2] : memref<128x32xf32, #tpu.memory_space<vmem>>, vector<128x32xf32>
    %cst = arith.constant dense<0.000000e+00> : vector<8x128xf32>
    %2 = tpu.matmul %0, %1, %cst {dimension_numbers = #tpu.dot_dimension_numbers<[1], [1], [0], [0], [0, 0, 1, 0], [], []>} : vector<8x32xf32>, vector<128x32xf32>, vector<8x128xf32> -> vector<8x128xf32>
    %c0_3 = arith.constant 0 : index
    %c0_4 = arith.constant 0 : index
    %3 = vector.load %arg4[%c0_3, %c0_4] : memref<1x128xf32, #tpu.memory_space<vmem>>, vector<1x128xf32>
    %4 = vector.broadcast %3 : vector<1x128xf32> to vector<8x128xf32>
    %5 = arith.addf %2, %4 : vector<8x128xf32>
    %cst_5 = arith.constant 0.000000e+00 : f32
    %6 = vector.broadcast %cst_5 : f32 to vector<8x128xf32>
    %7 = arith.maximumf %5, %6 : vector<8x128xf32>
    %cst_6 = arith.constant dense<0.000000e+00> : vector<8xf32>
    %8 = vector.multi_reduction <add>, %7, %cst_6 [1] : vector<8x128xf32> to vector<8xf32>
    %9 = vector.shape_cast %8 : vector<8xf32> to vector<8x1xf32>
    %cst_7 = arith.constant 1.280000e+02 : f32
    %10 = vector.broadcast %cst_7 : f32 to vector<8x1xf32>
    %11 = arith.divf %9, %10 : vector<8x1xf32>
    %12 = vector.broadcast %11 : vector<8x1xf32> to vector<8x128xf32>
    %13 = arith.subf %7, %12 : vector<8x128xf32>
    %14 = arith.mulf %13, %13 : vector<8x128xf32>
    %cst_8 = arith.constant dense<0.000000e+00> : vector<8xf32>
    %15 = vector.multi_reduction <add>, %14, %cst_8 [1] : vector<8x128xf32> to vector<8xf32>
    %16 = vector.shape_cast %15 : vector<8xf32> to vector<8x1xf32>
    %cst_9 = arith.constant 1.280000e+02 : f32
    %17 = vector.broadcast %cst_9 : f32 to vector<8x1xf32>
    %18 = arith.divf %16, %17 : vector<8x1xf32>
    %cst_10 = arith.constant 9.99999974E-6 : f32
    %19 = vector.broadcast %cst_10 : f32 to vector<8x1xf32>
    %20 = arith.addf %18, %19 : vector<8x1xf32>
    %21 = math.rsqrt %20 : vector<8x1xf32>
    %22 = vector.broadcast %21 : vector<8x1xf32> to vector<8x128xf32>
    %23 = arith.mulf %13, %22 : vector<8x128xf32>
    %c0_11 = arith.constant 0 : index
    %c0_12 = arith.constant 0 : index
    %24 = vector.load %arg5[%c0_11, %c0_12] : memref<1x128xf32, #tpu.memory_space<vmem>>, vector<1x128xf32>
    %25 = vector.broadcast %24 : vector<1x128xf32> to vector<8x128xf32>
    %26 = arith.mulf %23, %25 : vector<8x128xf32>
    %c0_13 = arith.constant 0 : index
    %c0_14 = arith.constant 0 : index
    %27 = vector.load %arg6[%c0_13, %c0_14] : memref<1x128xf32, #tpu.memory_space<vmem>>, vector<1x128xf32>
    %28 = vector.broadcast %27 : vector<1x128xf32> to vector<8x128xf32>
    %29 = arith.addf %26, %28 : vector<8x128xf32>
    %c0_15 = arith.constant 0 : index
    %c0_16 = arith.constant 0 : index
    %30 = vector.load %arg7[%c0_15, %c0_16] : memref<8x128xf32, #tpu.memory_space<vmem>>, vector<8x128xf32>
    tpu.vector_store %arg7[%c0_15, %c0_16], %29 {strides = array<i32>} : memref<8x128xf32, #tpu.memory_space<vmem>>, vector<8x128xf32>,
    return
  }
  func.func @transform_0(%arg0: i32) -> i32 {
    %c0_i32 = arith.constant 0 : i32
    %c0_i32_0 = arith.constant 0 : i32
    return %c0_i32 : i32
  }
  func.func @transform_1(%arg0: i32) -> (i32, i32) {
    %c0_i32 = arith.constant 0 : i32
    %c0_i32_0 = arith.constant 0 : i32
    return %arg0, %c0_i32 : i32, i32
  }
  func.func @transform_2(%arg0: i32) -> (i32, i32) {
    %c0_i32 = arith.constant 0 : i32
    %c0_i32_0 = arith.constant 0 : i32
    %c0_i32_1 = arith.constant 0 : i32
    return %c0_i32, %c0_i32_0 : i32, i32
  }
  func.func @transform_3(%arg0: i32) -> (i32, i32) {
    %c0_i32 = arith.constant 0 : i32
    %c0_i32_0 = arith.constant 0 : i32
    %c0_i32_1 = arith.constant 0 : i32
    return %c0_i32, %c0_i32_0 : i32, i32
  }
  func.func @transform_4(%arg0: i32) -> (i32, i32) {
    %c0_i32 = arith.constant 0 : i32
    %c0_i32_0 = arith.constant 0 : i32
    %c0_i32_1 = arith.constant 0 : i32
    return %c0_i32, %c0_i32_0 : i32, i32
  }
  func.func @transform_5(%arg0: i32) -> (i32, i32) {
    %c0_i32 = arith.constant 0 : i32
    %c0_i32_0 = arith.constant 0 : i32
    %c0_i32_1 = arith.constant 0 : i32
    return %c0_i32, %c0_i32_0 : i32, i32
  }
  func.func @transform_6(%arg0: i32) -> (i32, i32) {
    %c0_i32 = arith.constant 0 : i32
    %c0_i32_0 = arith.constant 0 : i32
    return %arg0, %c0_i32 : i32, i32
  }
}

</mosaic_0001>

<llo_original>
// kernel: tpu_custom_call.1
$region0: #{tpu_custom_call.1}
  #allocation0 [shape = 'u32[]', space=smem, size = 0x4, offset = 0x4, fixed_abs, tag = 'smem constant byte address 0x4 - core index']
  #allocation1 [shape = 'u32[144,128]{1,0:T(1,128)}', space=vmem, size = 0x12000, scoped, tag = 'internal scratch']
  #allocation2 [shape = 's32[1]{0:T(128)S(6)}', space=smem, size = 0x200, scoped, tag = 'scoped memory for tpu_custom_call.1']
  %s0 = inlined_call_operand.<no memory space> [shape: s32[1], index: 0, kind: input, shape index: {}]
  %s1 = inlined_call_operand.vmem [shape: f32[8,32], index: 1, kind: input, shape index: {}]
  %s2 = inlined_call_operand.vmem [shape: f32[128,32], index: 2, kind: input, shape index: {}]
  %s3 = inlined_call_operand.vmem [shape: f32[1,128], index: 3, kind: input, shape index: {}]
  %s4 = inlined_call_operand.vmem [shape: f32[1,128], index: 4, kind: input, shape index: {}]
  %s5 = inlined_call_operand.vmem [shape: f32[1,128], index: 5, kind: input, shape index: {}]
  %s6 = inlined_call_operand.hbm [shape: f32[8,128], index: 6, kind: output, shape index: {}]
  %s7 = sld [smem:[#allocation0]]
  $region34: #{tpu_custom_call.1} parent=0
    _
  %s9 = ssub.s32 1, %s7
  %s10 = scalar_select 0, %s9, %s7
  %11 = sst [smem:[#allocation2]] %s0
  $region1: #{tpu_custom_call.1} parent=0
    #allocation3 [shape = 'u8[4096]{0}', space=vmem, size = 0x1000, scoped, tag = 'output window, operand 0, single buffered']
    #allocation4 [shape = 's32[1]{0}', space=sflag, size = 0x4, scoped, tag = 'scoped memory for tpu_custom_call.1']
    %12 = vsyncpa [#allocation4], 0
    // Predicated region
    $region2: #{tpu_custom_call.1} parent=1 // pred_check
      _
    $region3: #{tpu_custom_call.1} parent=1 // pred_check_branch
      %14 = sbr.rel (0) target = $region5
    $region4: #{tpu_custom_call.1} parent=1 // pred_region
      _
    $region5: #{tpu_custom_call.1} parent=1 // pred_fallthru
      _
    // Predicated region
    $region6: #{tpu_custom_call.1} parent=1 // pred_check
      _
    $region7: #{tpu_custom_call.1} parent=1 // pred_check_branch
      %16 = sbr.rel (0) target = $region9
    $region8: #{tpu_custom_call.1} parent=1 // pred_region
      _
    $region9: #{tpu_custom_call.1} parent=1 // pred_fallthru
      _
    // Predicated region
    $region10: #{tpu_custom_call.1} parent=1 // pred_check
      _
    $region11: #{tpu_custom_call.1} parent=1 // pred_check_branch
      %18 = sbr.rel (0) target = $region13
    $region12: #{tpu_custom_call.1} parent=1 // pred_region
      _
    $region13: #{tpu_custom_call.1} parent=1 // pred_fallthru
      _
    // Predicated region
    $region14: #{tpu_custom_call.1} parent=1 // pred_check
      _
    $region15: #{tpu_custom_call.1} parent=1 // pred_check_branch
      %20 = sbr.rel (0) target = $region17
    $region16: #{tpu_custom_call.1} parent=1 // pred_region
      _
    $region17: #{tpu_custom_call.1} parent=1 // pred_fallthru
      _
    // Predicated region
    $region18: #{tpu_custom_call.1} parent=1 // pred_check
      _
    $region19: #{tpu_custom_call.1} parent=1 // pred_check_branch
      %22 = sbr.rel (0) target = $region21
    $region20: #{tpu_custom_call.1} parent=1 // pred_region
      _
    $region21: #{tpu_custom_call.1} parent=1 // pred_fallthru
      _
    // Predicated region
    $region22: #{tpu_custom_call.1} parent=1 // pred_check
      _
    $region23: #{tpu_custom_call.1} parent=1 // pred_check_branch
      %24 = sbr.rel (0) target = $region25
    $region24: #{tpu_custom_call.1} parent=1 // pred_region
      _
    $region25: #{tpu_custom_call.1} parent=1 // pred_fallthru
      _
    %v25 = vld [vmem:[%s1] sm:$0xff]
    %v26 = vld [vmem:[%s2] sm:$0xff]
    %v27 = vld [vmem:[%s2 + $0x8] sm:$0xff]
    %v28 = vld [vmem:[%s2 + $0x10] sm:$0xff]
    %v29 = vld [vmem:[%s2 + $0x18] sm:$0xff]
    %v30 = vld [vmem:[%s2 + $0x20] sm:$0xff]
    %v31 = vld [vmem:[%s2 + $0x28] sm:$0xff]
    %v32 = vld [vmem:[%s2 + $0x30] sm:$0xff]
    %v33 = vld [vmem:[%s2 + $0x38] sm:$0xff]
    %v34 = vld [vmem:[%s2 + $0x40] sm:$0xff]
    %v35 = vld [vmem:[%s2 + $0x48] sm:$0xff]
    %v36 = vld [vmem:[%s2 + $0x50] sm:$0xff]
    %v37 = vld [vmem:[%s2 + $0x58] sm:$0xff]
    %v38 = vld [vmem:[%s2 + $0x60] sm:$0xff]
    %v39 = vld [vmem:[%s2 + $0x68] sm:$0xff]
    %v40 = vld [vmem:[%s2 + $0x70] sm:$0xff]
    %v41 = vld [vmem:[%s2 + $0x78] sm:$0xff]
    %v42 = vld [vmem:[%s3] sm:$0x1]
    %v44 = vlaneseq
    %v45 = vshrl.u32 %v44, 7
    %v46 = vsub.s32 0, %v45
    %v47 = vrot.slane %v42, %v46
    %vm49 = vcmask 261120
    %v51 = vsel %vm49, %v25, 0
    %v54 = vsel %vm49, %v26, 0
    %v57 = vsel %vm49, %v27, 0
    %v60 = vsel %vm49, %v28, 0
    %v63 = vsel %vm49, %v29, 0
    %v66 = vsel %vm49, %v30, 0
    %v69 = vsel %vm49, %v31, 0
    %v72 = vsel %vm49, %v32, 0
    %v75 = vsel %vm49, %v33, 0
    %v78 = vsel %vm49, %v34, 0
    %v81 = vsel %vm49, %v35, 0
    %v84 = vsel %vm49, %v36, 0
    %v87 = vsel %vm49, %v37, 0
    %v90 = vsel %vm49, %v38, 0
    %v93 = vsel %vm49, %v39, 0
    %v96 = vsel %vm49, %v40, 0
    %v99 = vsel %vm49, %v41, 0
    %101 = vmatprep.subr.mxu0 0.0
    %102 = vmatpush1.xpose.msra.mxu0 %v54
    %103 = vmatprep.subr.mxu0 0.0
    %104 = vmatpush1.xpose.msra.mxu0 %v57
    %105 = vmatprep.subr.mxu0 0.0
    %106 = vmatpush1.xpose.msra.mxu0 %v60
    %107 = vmatprep.subr.mxu0 0.0
    %108 = vmatpush1.xpose.msra.mxu0 %v63
    %109 = vmatprep.subr.mxu0 0.0
    %110 = vmatpush1.xpose.msra.mxu0 %v66
    %111 = vmatprep.subr.mxu0 0.0
    %112 = vmatpush1.xpose.msra.mxu0 %v69
    %113 = vmatprep.subr.mxu0 0.0
    %114 = vmatpush1.xpose.msra.mxu0 %v72
    %115 = vmatprep.subr.mxu0 0.0
    %116 = vmatpush1.xpose.msra.mxu0 %v75
    %117 = vmatprep.subr.mxu0 0.0
    %118 = vmatpush1.xpose.msra.mxu0 %v78
    %119 = vmatprep.subr.mxu0 0.0
    %120 = vmatpush1.xpose.msra.mxu0 %v81
    %121 = vmatprep.subr.mxu0 0.0
    %122 = vmatpush1.xpose.msra.mxu0 %v84
    %123 = vmatprep.subr.mxu0 0.0
    %124 = vmatpush1.xpose.msra.mxu0 %v87
    %125 = vmatprep.subr.mxu0 0.0
    %126 = vmatpush1.xpose.msra.mxu0 %v90
    %127 = vmatprep.subr.mxu0 0.0
    %128 = vmatpush1.xpose.msra.mxu0 %v93
    %129 = vmatprep.subr.mxu0 0.0
    %130 = vmatpush1.xpose.msra.mxu0 %v96
    %131 = vmatprep.subr.mxu0 0.0
    %132 = vmatpush1.xpose.msra.mxu0 %v99
    %133 = vmatprep.subr.mxu0 0.0
    %134 = vmatpush1.xpose.msra.mxu0 0.0
    %135 = vmatprep.subr.mxu0 0.0
    %136 = vmatpush1.xpose.msra.mxu0 0.0
    %137 = vmatprep.subr.mxu0 0.0
    %138 = vmatpush1.xpose.msra.mxu0 0.0
    %139 = vmatprep.subr.mxu0 0.0
    %140 = vmatpush1.xpose.msra.mxu0 0.0
    %141 = vmatprep.subr.mxu0 0.0
    %142 = vmatpush1.xpose.msra.mxu0 0.0
    %143 = vmatprep.subr.mxu0 0.0
    %144 = vmatpush1.xpose.msra.mxu0 0.0
    %145 = vmatprep.subr.mxu0 0.0
    %146 = vmatpush1.xpose.msra.mxu0 0.0
    %147 = vmatprep.subr.mxu0 0.0
    %148 = vmatpush1.xpose.msra.mxu0 0.0
    %149 = vmatprep.subr.mxu0 0.0
    %150 = vmatpush1.xpose.msra.mxu0 0.0
    %151 = vmatprep.subr.mxu0 0.0
    %152 = vmatpush1.xpose.msra.mxu0 0.0
    %153 = vmatprep.subr.mxu0 0.0
    %154 = vmatpush1.xpose.msra.mxu0 0.0
    %155 = vmatprep.subr.mxu0 0.0
    %156 = vmatpush1.xpose.msra.mxu0 0.0
    %157 = vmatprep.subr.mxu0 0.0
    %158 = vmatpush1.xpose.msra.mxu0 0.0
    %159 = vmatprep.subr.mxu0 0.0
    %160 = vmatpush1.xpose.msra.mxu0 0.0
    %161 = vmatprep.subr.mxu0 0.0
    %162 = vmatpush1.xpose.msra.mxu0 0.0
    %163 = vmatprep.subr.mxu0 0.0
    %164 = vmatpush1.xpose.msra.mxu0 0.0
    %165 = vmatprep.mubr.f32.mxu0 0.0
    %166 = vmatmul.mubr.f32.gmra.mrb[0].mxu0 %v51
    %v167 = vpop.f32.mrb[0].mxu0
    %v168 = vadd.f32 %v47, %v167
    %v169 = vpop.f32.mrb[0].mxu0
    %170 = vdwg.mxu0
    %v171 = vmax.f32 %v168, 0.0
    %172 = vadd.xlane.f32.xlu0 %v171
    %v173 = vpop.xlane.xlu0 %172
    %v174 = vrcp.pop 128.0
    %v175 = vmul.f32 %v173, %v174
    %v176 = vsub.f32 %v171, %v175
    %v177 = vmul.f32 %v176, %v176
    %178 = vadd.xlane.f32.xlu0 %v177
    %v179 = vpop.xlane.xlu0 %178
    %v180 = vmul.f32 %v179, %v174
    %v181 = vadd.f32 %v180, 1e-05
    %v182 = vrsqrt.pop %v181
    %v183 = vmul.f32 %v176, %v182
    %v184 = vld [vmem:[%s4] sm:$0x1]
    %v186 = vlaneseq
    %v187 = vshrl.u32 %v186, 7
    %v188 = vsub.s32 0, %v187
    %v189 = vrot.slane %v184, %v188
    %v191 = vmul.f32 %v183, %v189
    %v192 = vld [vmem:[%s5] sm:$0x1]
    %v194 = vlaneseq
    %v195 = vshrl.u32 %v194, 7
    %v196 = vsub.s32 0, %v195
    %v197 = vrot.slane %v192, %v196
    %v199 = vadd.f32 %v191, %v197
    %200 = vst [vmem:[#allocation3] sm:$0xff] %v199
    // Predicated region
    $region26: #{tpu_custom_call.1} parent=1 // pred_check
      _
    $region27: #{tpu_custom_call.1} parent=1 // pred_check_branch
      %202 = sbr.rel (0) target = $region29
    $region28: #{tpu_custom_call.1} parent=1 // pred_region
      %s204 = ssub.s32 128, 128
      %205 = vsyncadd [#allocation4], %s204
      %s207 = sshll.u32 [#allocation3], 4
      %s208 = int_to_ptr.vmem [resolvable:$true] %s207
      %210 = dma.vmem_to_hbm [thread:$0]  %s208, 128, %s6, [#allocation4]
    $region29: #{tpu_custom_call.1} parent=1 // pred_fallthru
      _
    // Predicated region
    $region30: #{tpu_custom_call.1} parent=1 // pred_check
      _
    $region31: #{tpu_custom_call.1} parent=1 // pred_check_branch
      %212 = sbr.rel (0) target = $region33
    $region32: #{tpu_custom_call.1} parent=1 // pred_region
      %213 = dma.done [#allocation4], 128
    $region33: #{tpu_custom_call.1} parent=1 // pred_fallthru
      _
    %214 = vsyncpa [#allocation4], 1

</llo_original>
